<compile_context>
chip_gen: v5e
topology: v5e:2x2
jax: 0.10.0
libtpu: 0.0.40
codegen_flags: <defaults>
</compile_context>

<pallas_src>
import jax
import jax.numpy as jnp
from jax.experimental import pallas as pl
from jax.experimental.pallas import tpu as pltpu


def lstm_fc_kernel(x_ref, wih_ref, whh_ref, b_ref, wfc_ref, bfc_ref,
                   out_ref, xg_scr):
    """Single invocation: batched input GEMM for all steps, then the serial recurrence."""
    TB = x_ref.shape[0]
    B = out_ref.shape[0]
    T = TB // B
    H4 = whh_ref.shape[1]
    H = H4 // 4

    # (1) Hoisted input projection for all T steps: one (T*B, I) x (I, 4H) MXU matmul
    #     (bf16 operands, f32 accumulation), bias folded in, stored to VMEM scratch.
    xg_scr[...] = (
        jnp.dot(x_ref[...], wih_ref[...], preferred_element_type=jnp.float32)
        + b_ref[...])

    # Lane masks (PyTorch gate order along 4H: i, f, g, o). All four gates are
    # evaluated with ONE whole-vreg tanh (EUP) per step via
    #   sigmoid(x) = 0.5 * tanh(0.5 * x) + 0.5
    # for the i/f/o lanes; the g lanes get plain tanh. Constants are hoisted.
    lane = jax.lax.broadcasted_iota(jnp.int32, (B, H4), 1)
    is_g_lane = (lane >= 2 * H) & (lane < 3 * H)
    pre_scale = jnp.where(is_g_lane, 1.0, 0.5)    # multiply before tanh
    post_scale = pre_scale                         # multiply after tanh (same values)
    post_shift = jnp.where(is_g_lane, 0.0, 0.5)    # add after tanh

    whh = whh_ref[...]                             # (H, 4H) bf16, hoisted

    # (2) Serial recurrence: only h @ W_hh^T per step; h/c carried as loop values.
    def step(t, carry):
        h, c = carry                               # (B, H) f32 each
        row = pl.multiple_of(t * B, B)
        xg_t = xg_scr[pl.ds(row, B), :]            # (B, 4H) f32 (incl. bias)
        gates = xg_t + jnp.dot(h.astype(jnp.bfloat16), whh,
                               preferred_element_type=jnp.float32)
        # Single whole-vreg tanh + lane-masked affine covers sigmoid(i,f,o) and tanh(g).
        act = jnp.tanh(gates * pre_scale) * post_scale + post_shift
        i_g = act[:, 0 * H:1 * H]
        f_g = act[:, 1 * H:2 * H]
        g_g = act[:, 2 * H:3 * H]
        o_g = act[:, 3 * H:4 * H]
        c_new = f_g * c + i_g * g_g
        h_new = o_g * jnp.tanh(c_new)
        return h_new, c_new

    h0 = jnp.zeros((B, H), jnp.float32)
    c0 = jnp.zeros((B, H), jnp.float32)
    h_last, _ = jax.lax.fori_loop(0, T, step, (h0, c0), unroll=True)

    # (3) Dropout is identity in eval mode; FC head (H -> 1) as a VPU multiply +
    #     lane reduce instead of a <1%-utilized MXU matmul; bias read from SMEM.
    out_ref[...] = (jnp.sum(h_last * wfc_ref[...], axis=1, keepdims=True)
                    + bfc_ref[0])


def lstm_model_forward(x, params):
    """x: (B, T, I) float32. Returns (B,) float32 (== torch out.squeeze())."""
    B, T, I = x.shape
    H = params["w_hh"].shape[1]

    # Time-major, flattened so the input projection is a single batched matmul.
    x2d = jnp.transpose(x, (1, 0, 2)).reshape(T * B, I).astype(jnp.bfloat16)
    wih_t = params["w_ih"].T.astype(jnp.bfloat16)                 # (I, 4H)
    whh_t = params["w_hh"].T.astype(jnp.bfloat16)                 # (H, 4H)
    b = (params["b_ih"] + params["b_hh"]).reshape(1, 4 * H)       # (1, 4H) f32
    wfc = params["w_fc"].reshape(1, H).astype(jnp.float32)        # (1, H)  f32
    bfc = params["b_fc"].reshape(1).astype(jnp.float32)           # (1,)    f32 -> SMEM

    out = pl.pallas_call(
        lstm_fc_kernel,
        out_shape=jax.ShapeDtypeStruct((B, 1), jnp.float32),
        in_specs=[
            pl.BlockSpec(memory_space=pltpu.MemorySpace.VMEM),    # x2d   (T*B, I)
            pl.BlockSpec(memory_space=pltpu.MemorySpace.VMEM),    # W_ih^T (I, 4H)
            pl.BlockSpec(memory_space=pltpu.MemorySpace.VMEM),    # W_hh^T (H, 4H)
            pl.BlockSpec(memory_space=pltpu.MemorySpace.VMEM),    # b_ih + b_hh
            pl.BlockSpec(memory_space=pltpu.MemorySpace.VMEM),    # W_fc   (1, H)
            pl.BlockSpec(memory_space=pltpu.MemorySpace.SMEM),    # b_fc   (1,)
        ],
        out_specs=pl.BlockSpec(memory_space=pltpu.MemorySpace.VMEM),
        scratch_shapes=[pltpu.VMEM((T * B, 4 * H), jnp.float32)],  # hoisted input GEMM
    )(x2d, wih_t, whh_t, b, wfc, bfc)
    # TODO(synk): num_layers > 1 / bidirectional configs would stack / reverse this
    # kernel; only the num_layers=1, unidirectional config is implemented here.
    # TODO(synk): for B >= ~256 on v7x, add a "parallel" batch grid axis (h/c scratch
    # tiled over batch) to engage the second TensorCore; at B=8 one call is optimal.
    return out[:, 0]                                              # squeeze -> (B,)


def lstm_model_reference(x, params):
    """Pure-JAX reference with the same bf16-operand / f32-accumulate matmul policy
    as the kernel (matches PyTorch f32 math up to bf16 operand rounding)."""
    B, T, I = x.shape
    H = params["w_hh"].shape[1]
    wih_t = params["w_ih"].T.astype(jnp.bfloat16)
    whh_t = params["w_hh"].T.astype(jnp.bfloat16)
    b = (params["b_ih"] + params["b_hh"]).astype(jnp.float32)

    x2d = jnp.transpose(x, (1, 0, 2)).reshape(T * B, I).astype(jnp.bfloat16)
    xg = jnp.dot(x2d, wih_t, preferred_element_type=jnp.float32) + b
    xg = xg.reshape(T, B, 4 * H)

    def step(carry, xg_t):
        h, c = carry
        gates = xg_t + jnp.dot(h.astype(jnp.bfloat16), whh_t,
                               preferred_element_type=jnp.float32)
        i_g = jax.nn.sigmoid(gates[:, 0 * H:1 * H])
        f_g = jax.nn.sigmoid(gates[:, 1 * H:2 * H])
        g_g = jnp.tanh(gates[:, 2 * H:3 * H])
        o_g = jax.nn.sigmoid(gates[:, 3 * H:4 * H])
        c = f_g * c + i_g * g_g
        h = o_g * jnp.tanh(c)
        return (h, c), None

    h0 = jnp.zeros((B, H), jnp.float32)
    c0 = jnp.zeros((B, H), jnp.float32)
    (h, _), _ = jax.lax.scan(step, (h0, c0), xg)
    out = h @ params["w_fc"].T + params["b_fc"]
    return out[:, 0]


def init_params(key, input_size, hidden_size):
    """Deterministic init mimicking PyTorch's U(-1/sqrt(H), 1/sqrt(H))."""
    k = 1.0 / jnp.sqrt(hidden_size)
    keys = jax.random.split(key, 6)
    u = lambda kk, shape: jax.random.uniform(kk, shape, jnp.float32, -k, k)
    return {
        "w_ih": u(keys[0], (4 * hidden_size, input_size)),
        "w_hh": u(keys[1], (4 * hidden_size, hidden_size)),
        "b_ih": u(keys[2], (4 * hidden_size,)),
        "b_hh": u(keys[3], (4 * hidden_size,)),
        "w_fc": u(keys[4], (1, hidden_size)),
        "b_fc": u(keys[5], (1,)),
    }


if __name__ == "__main__":
    B, T, I, H = 8, 8, 16, 32     # batch, seq_len, input_size, hidden_size

    key = jax.random.PRNGKey(0)
    k_x, k_p = jax.random.split(key)
    x = jax.random.normal(k_x, (B, T, I), jnp.float32)
    params = init_params(k_p, I, H)

    fwd = jax.jit(lstm_model_forward)
    out = jax.block_until_ready(fwd(x, params))
    ref = jax.block_until_ready(lstm_model_reference(x, params))

    assert out.shape == (B,)
    assert jnp.allclose(out, ref, atol=2e-3, rtol=2e-3), (out, ref)
    print("KERNEL_OK")
</pallas_src>

<mosaic_0001>
module attributes {stable_mosaic.version = 11 : i64} {
  func.func @lstm_fc_kernel(%arg0: memref<64x16xbf16, #tpu.memory_space<vmem>>, %arg1: memref<16x128xbf16, #tpu.memory_space<vmem>>, %arg2: memref<32x128xbf16, #tpu.memory_space<vmem>>, %arg3: memref<1x128xf32, #tpu.memory_space<vmem>>, %arg4: memref<1x32xf32, #tpu.memory_space<vmem>>, %arg5: memref<1xf32, #tpu.memory_space<smem>>, %arg6: memref<8x1xf32, #tpu.memory_space<vmem>>, %arg7: memref<64x128xf32, #tpu.memory_space<vmem>>) attributes {dimension_semantics = [], scalar_prefetch = 0 : i64, scratch_operands = 1 : i64, tpu.core_type = #tpu.core_type<tc>} {
    %c0 = arith.constant 0 : index
    %c0_0 = arith.constant 0 : index
    %0 = vector.load %arg0[%c0, %c0_0] : memref<64x16xbf16, #tpu.memory_space<vmem>>, vector<64x16xbf16>
    %c0_1 = arith.constant 0 : index
    %c0_2 = arith.constant 0 : index
    %1 = vector.load %arg1[%c0_1, %c0_2] : memref<16x128xbf16, #tpu.memory_space<vmem>>, vector<16x128xbf16>
    %cst = arith.constant dense<0.000000e+00> : vector<64x128xf32>
    %2 = tpu.matmul %0, %1, %cst {dimension_numbers = #tpu.dot_dimension_numbers<[1], [0], [0], [1], [0, 0, 1, 1], [], []>} : vector<64x16xbf16>, vector<16x128xbf16>, vector<64x128xf32> -> vector<64x128xf32>
    %c0_3 = arith.constant 0 : index
    %c0_4 = arith.constant 0 : index
    %3 = vector.load %arg3[%c0_3, %c0_4] : memref<1x128xf32, #tpu.memory_space<vmem>>, vector<1x128xf32>
    %4 = vector.broadcast %3 : vector<1x128xf32> to vector<64x128xf32>
    %5 = arith.addf %2, %4 : vector<64x128xf32>
    %c0_5 = arith.constant 0 : index
    %c0_6 = arith.constant 0 : index
    %6 = vector.load %arg7[%c0_5, %c0_6] : memref<64x128xf32, #tpu.memory_space<vmem>>, vector<64x128xf32>
    tpu.vector_store %arg7[%c0_5, %c0_6], %5 {strides = array<i32>} : memref<64x128xf32, #tpu.memory_space<vmem>>, vector<64x128xf32>,
    %7 = tpu.iota {dimensions = array<i32: 1>} : vector<8x128xi32>
    %c64_i32 = arith.constant 64 : i32
    %8 = vector.broadcast %c64_i32 : i32 to vector<8x128xi32>
    %9 = arith.cmpi sge, %7, %8 : vector<8x128xi32>
    %c96_i32 = arith.constant 96 : i32
    %10 = vector.broadcast %c96_i32 : i32 to vector<8x128xi32>
    %11 = arith.cmpi slt, %7, %10 : vector<8x128xi32>
    %12 = arith.andi %9, %11 : vector<8x128xi1>
    %cst_7 = arith.constant 1.000000e+00 : f32
    %cst_8 = arith.constant 5.000000e-01 : f32
    %13 = vector.broadcast %cst_7 : f32 to vector<8x128xf32>
    %14 = vector.broadcast %cst_8 : f32 to vector<8x128xf32>
    %15 = arith.select %12, %13, %14 : vector<8x128xi1>, vector<8x128xf32>
    %cst_9 = arith.constant 0.000000e+00 : f32
    %cst_10 = arith.constant 5.000000e-01 : f32
    %16 = vector.broadcast %cst_9 : f32 to vector<8x128xf32>
    %17 = vector.broadcast %cst_10 : f32 to vector<8x128xf32>
    %18 = arith.select %12, %16, %17 : vector<8x128xi1>, vector<8x128xf32>
    %c0_11 = arith.constant 0 : index
    %c0_12 = arith.constant 0 : index
    %19 = vector.load %arg2[%c0_11, %c0_12] : memref<32x128xbf16, #tpu.memory_space<vmem>>, vector<32x128xbf16>
    %cst_13 = arith.constant 0.000000e+00 : f32
    %20 = vector.broadcast %cst_13 : f32 to vector<8x32xf32>
    %cst_14 = arith.constant 0.000000e+00 : f32
    %21 = vector.broadcast %cst_14 : f32 to vector<8x32xf32>
    %c0_i32 = arith.constant 0 : i32
    %c8_i32 = arith.constant 8 : i32
    %22 = arith.muli %c0_i32, %c8_i32 : i32
    %23 = tpu.assume_multiple %22, 8 : i32
    %24 = arith.index_cast %23 : i32 to index
    %c0_15 = arith.constant 0 : index
    %25 = vector.load %arg7[%24, %c0_15] : memref<64x128xf32, #tpu.memory_space<vmem>>, vector<8x128xf32>
    %26 = arith.truncf %20 : vector<8x32xf32> to vector<8x32xbf16>
    %cst_16 = arith.constant dense<0.000000e+00> : vector<8x128xf32>
    %27 = tpu.matmul %26, %19, %cst_16 {dimension_numbers = #tpu.dot_dimension_numbers<[1], [0], [0], [1], [0, 0, 1, 1], [], []>} : vector<8x32xbf16>, vector<32x128xbf16>, vector<8x128xf32> -> vector<8x128xf32>
    %28 = arith.addf %25, %27 : vector<8x128xf32>
    %29 = arith.mulf %28, %15 : vector<8x128xf32>
    %30 = math.tanh %29 : vector<8x128xf32>
    %31 = arith.mulf %30, %15 : vector<8x128xf32>
    %32 = arith.addf %31, %18 : vector<8x128xf32>
    %33 = vector.extract_strided_slice %32 {offsets = [0, 0], sizes = [8, 32], strides = [1, 1]} : vector<8x128xf32> to vector<8x32xf32>
    %34 = vector.extract_strided_slice %32 {offsets = [0, 32], sizes = [8, 32], strides = [1, 1]} : vector<8x128xf32> to vector<8x32xf32>
    %35 = vector.extract_strided_slice %32 {offsets = [0, 64], sizes = [8, 32], strides = [1, 1]} : vector<8x128xf32> to vector<8x32xf32>
    %36 = vector.extract_strided_slice %32 {offsets = [0, 96], sizes = [8, 32], strides = [1, 1]} : vector<8x128xf32> to vector<8x32xf32>
    %37 = arith.mulf %34, %21 : vector<8x32xf32>
    %38 = arith.mulf %33, %35 : vector<8x32xf32>
    %39 = arith.addf %37, %38 : vector<8x32xf32>
    %40 = math.tanh %39 : vector<8x32xf32>
    %41 = arith.mulf %36, %40 : vector<8x32xf32>
    %c1_i32 = arith.constant 1 : i32
    %c8_i32_17 = arith.constant 8 : i32
    %42 = arith.muli %c1_i32, %c8_i32_17 : i32
    %43 = tpu.assume_multiple %42, 8 : i32
    %44 = arith.index_cast %43 : i32 to index
    %c0_18 = arith.constant 0 : index
    %45 = vector.load %arg7[%44, %c0_18] : memref<64x128xf32, #tpu.memory_space<vmem>>, vector<8x128xf32>
    %46 = arith.truncf %41 : vector<8x32xf32> to vector<8x32xbf16>
    %cst_19 = arith.constant dense<0.000000e+00> : vector<8x128xf32>
    %47 = tpu.matmul %46, %19, %cst_19 {dimension_numbers = #tpu.dot_dimension_numbers<[1], [0], [0], [1], [0, 0, 1, 1], [], []>} : vector<8x32xbf16>, vector<32x128xbf16>, vector<8x128xf32> -> vector<8x128xf32>
    %48 = arith.addf %45, %47 : vector<8x128xf32>
    %49 = arith.mulf %48, %15 : vector<8x128xf32>
    %50 = math.tanh %49 : vector<8x128xf32>
    %51 = arith.mulf %50, %15 : vector<8x128xf32>
    %52 = arith.addf %51, %18 : vector<8x128xf32>
    %53 = vector.extract_strided_slice %52 {offsets = [0, 0], sizes = [8, 32], strides = [1, 1]} : vector<8x128xf32> to vector<8x32xf32>
    %54 = vector.extract_strided_slice %52 {offsets = [0, 32], sizes = [8, 32], strides = [1, 1]} : vector<8x128xf32> to vector<8x32xf32>
    %55 = vector.extract_strided_slice %52 {offsets = [0, 64], sizes = [8, 32], strides = [1, 1]} : vector<8x128xf32> to vector<8x32xf32>
    %56 = vector.extract_strided_slice %52 {offsets = [0, 96], sizes = [8, 32], strides = [1, 1]} : vector<8x128xf32> to vector<8x32xf32>
    %57 = arith.mulf %54, %39 : vector<8x32xf32>
    %58 = arith.mulf %53, %55 : vector<8x32xf32>
    %59 = arith.addf %57, %58 : vector<8x32xf32>
    %60 = math.tanh %59 : vector<8x32xf32>
    %61 = arith.mulf %56, %60 : vector<8x32xf32>
    %c2_i32 = arith.constant 2 : i32
    %c8_i32_20 = arith.constant 8 : i32
    %62 = arith.muli %c2_i32, %c8_i32_20 : i32
    %63 = tpu.assume_multiple %62, 8 : i32
    %64 = arith.index_cast %63 : i32 to index
    %c0_21 = arith.constant 0 : index
    %65 = vector.load %arg7[%64, %c0_21] : memref<64x128xf32, #tpu.memory_space<vmem>>, vector<8x128xf32>
    %66 = arith.truncf %61 : vector<8x32xf32> to vector<8x32xbf16>
    %cst_22 = arith.constant dense<0.000000e+00> : vector<8x128xf32>
    %67 = tpu.matmul %66, %19, %cst_22 {dimension_numbers = #tpu.dot_dimension_numbers<[1], [0], [0], [1], [0, 0, 1, 1], [], []>} : vector<8x32xbf16>, vector<32x128xbf16>, vector<8x128xf32> -> vector<8x128xf32>
    %68 = arith.addf %65, %67 : vector<8x128xf32>
    %69 = arith.mulf %68, %15 : vector<8x128xf32>
    %70 = math.tanh %69 : vector<8x128xf32>
    %71 = arith.mulf %70, %15 : vector<8x128xf32>
    %72 = arith.addf %71, %18 : vector<8x128xf32>
    %73 = vector.extract_strided_slice %72 {offsets = [0, 0], sizes = [8, 32], strides = [1, 1]} : vector<8x128xf32> to vector<8x32xf32>
    %74 = vector.extract_strided_slice %72 {offsets = [0, 32], sizes = [8, 32], strides = [1, 1]} : vector<8x128xf32> to vector<8x32xf32>
    %75 = vector.extract_strided_slice %72 {offsets = [0, 64], sizes = [8, 32], strides = [1, 1]} : vector<8x128xf32> to vector<8x32xf32>
    %76 = vector.extract_strided_slice %72 {offsets = [0, 96], sizes = [8, 32], strides = [1, 1]} : vector<8x128xf32> to vector<8x32xf32>
    %77 = arith.mulf %74, %59 : vector<8x32xf32>
    %78 = arith.mulf %73, %75 : vector<8x32xf32>
    %79 = arith.addf %77, %78 : vector<8x32xf32>
    %80 = math.tanh %79 : vector<8x32xf32>
    %81 = arith.mulf %76, %80 : vector<8x32xf32>
    %c3_i32 = arith.constant 3 : i32
    %c8_i32_23 = arith.constant 8 : i32
    %82 = arith.muli %c3_i32, %c8_i32_23 : i32
    %83 = tpu.assume_multiple %82, 8 : i32
    %84 = arith.index_cast %83 : i32 to index
    %c0_24 = arith.constant 0 : index
    %85 = vector.load %arg7[%84, %c0_24] : memref<64x128xf32, #tpu.memory_space<vmem>>, vector<8x128xf32>
    %86 = arith.truncf %81 : vector<8x32xf32> to vector<8x32xbf16>
    %cst_25 = arith.constant dense<0.000000e+00> : vector<8x128xf32>
    %87 = tpu.matmul %86, %19, %cst_25 {dimension_numbers = #tpu.dot_dimension_numbers<[1], [0], [0], [1], [0, 0, 1, 1], [], []>} : vector<8x32xbf16>, vector<32x128xbf16>, vector<8x128xf32> -> vector<8x128xf32>
    %88 = arith.addf %85, %87 : vector<8x128xf32>
    %89 = arith.mulf %88, %15 : vector<8x128xf32>
    %90 = math.tanh %89 : vector<8x128xf32>
    %91 = arith.mulf %90, %15 : vector<8x128xf32>
    %92 = arith.addf %91, %18 : vector<8x128xf32>
    %93 = vector.extract_strided_slice %92 {offsets = [0, 0], sizes = [8, 32], strides = [1, 1]} : vector<8x128xf32> to vector<8x32xf32>
    %94 = vector.extract_strided_slice %92 {offsets = [0, 32], sizes = [8, 32], strides = [1, 1]} : vector<8x128xf32> to vector<8x32xf32>
    %95 = vector.extract_strided_slice %92 {offsets = [0, 64], sizes = [8, 32], strides = [1, 1]} : vector<8x128xf32> to vector<8x32xf32>
    %96 = vector.extract_strided_slice %92 {offsets = [0, 96], sizes = [8, 32], strides = [1, 1]} : vector<8x128xf32> to vector<8x32xf32>
    %97 = arith.mulf %94, %79 : vector<8x32xf32>
    %98 = arith.mulf %93, %95 : vector<8x32xf32>
    %99 = arith.addf %97, %98 : vector<8x32xf32>
    %100 = math.tanh %99 : vector<8x32xf32>
    %101 = arith.mulf %96, %100 : vector<8x32xf32>
    %c4_i32 = arith.constant 4 : i32
    %c8_i32_26 = arith.constant 8 : i32
    %102 = arith.muli %c4_i32, %c8_i32_26 : i32
    %103 = tpu.assume_multiple %102, 8 : i32
    %104 = arith.index_cast %103 : i32 to index
    %c0_27 = arith.constant 0 : index
    %105 = vector.load %arg7[%104, %c0_27] : memref<64x128xf32, #tpu.memory_space<vmem>>, vector<8x128xf32>
    %106 = arith.truncf %101 : vector<8x32xf32> to vector<8x32xbf16>
    %cst_28 = arith.constant dense<0.000000e+00> : vector<8x128xf32>
    %107 = tpu.matmul %106, %19, %cst_28 {dimension_numbers = #tpu.dot_dimension_numbers<[1], [0], [0], [1], [0, 0, 1, 1], [], []>} : vector<8x32xbf16>, vector<32x128xbf16>, vector<8x128xf32> -> vector<8x128xf32>
    %108 = arith.addf %105, %107 : vector<8x128xf32>
    %109 = arith.mulf %108, %15 : vector<8x128xf32>
    %110 = math.tanh %109 : vector<8x128xf32>
    %111 = arith.mulf %110, %15 : vector<8x128xf32>
    %112 = arith.addf %111, %18 : vector<8x128xf32>
    %113 = vector.extract_strided_slice %112 {offsets = [0, 0], sizes = [8, 32], strides = [1, 1]} : vector<8x128xf32> to vector<8x32xf32>
    %114 = vector.extract_strided_slice %112 {offsets = [0, 32], sizes = [8, 32], strides = [1, 1]} : vector<8x128xf32> to vector<8x32xf32>
    %115 = vector.extract_strided_slice %112 {offsets = [0, 64], sizes = [8, 32], strides = [1, 1]} : vector<8x128xf32> to vector<8x32xf32>
    %116 = vector.extract_strided_slice %112 {offsets = [0, 96], sizes = [8, 32], strides = [1, 1]} : vector<8x128xf32> to vector<8x32xf32>
    %117 = arith.mulf %114, %99 : vector<8x32xf32>
    %118 = arith.mulf %113, %115 : vector<8x32xf32>
    %119 = arith.addf %117, %118 : vector<8x32xf32>
    %120 = math.tanh %119 : vector<8x32xf32>
    %121 = arith.mulf %116, %120 : vector<8x32xf32>
    %c5_i32 = arith.constant 5 : i32
    %c8_i32_29 = arith.constant 8 : i32
    %122 = arith.muli %c5_i32, %c8_i32_29 : i32
    %123 = tpu.assume_multiple %122, 8 : i32
    %124 = arith.index_cast %123 : i32 to index
    %c0_30 = arith.constant 0 : index
    %125 = vector.load %arg7[%124, %c0_30] : memref<64x128xf32, #tpu.memory_space<vmem>>, vector<8x128xf32>
    %126 = arith.truncf %121 : vector<8x32xf32> to vector<8x32xbf16>
    %cst_31 = arith.constant dense<0.000000e+00> : vector<8x128xf32>
    %127 = tpu.matmul %126, %19, %cst_31 {dimension_numbers = #tpu.dot_dimension_numbers<[1], [0], [0], [1], [0, 0, 1, 1], [], []>} : vector<8x32xbf16>, vector<32x128xbf16>, vector<8x128xf32> -> vector<8x128xf32>
    %128 = arith.addf %125, %127 : vector<8x128xf32>
    %129 = arith.mulf %128, %15 : vector<8x128xf32>
    %130 = math.tanh %129 : vector<8x128xf32>
    %131 = arith.mulf %130, %15 : vector<8x128xf32>
    %132 = arith.addf %131, %18 : vector<8x128xf32>
    %133 = vector.extract_strided_slice %132 {offsets = [0, 0], sizes = [8, 32], strides = [1, 1]} : vector<8x128xf32> to vector<8x32xf32>
    %134 = vector.extract_strided_slice %132 {offsets = [0, 32], sizes = [8, 32], strides = [1, 1]} : vector<8x128xf32> to vector<8x32xf32>
    %135 = vector.extract_strided_slice %132 {offsets = [0, 64], sizes = [8, 32], strides = [1, 1]} : vector<8x128xf32> to vector<8x32xf32>
    %136 = vector.extract_strided_slice %132 {offsets = [0, 96], sizes = [8, 32], strides = [1, 1]} : vector<8x128xf32> to vector<8x32xf32>
    %137 = arith.mulf %134, %119 : vector<8x32xf32>
    %138 = arith.mulf %133, %135 : vector<8x32xf32>
    %139 = arith.addf %137, %138 : vector<8x32xf32>
    %140 = math.tanh %139 : vector<8x32xf32>
    %141 = arith.mulf %136, %140 : vector<8x32xf32>
    %c6_i32 = arith.constant 6 : i32
    %c8_i32_32 = arith.constant 8 : i32
    %142 = arith.muli %c6_i32, %c8_i32_32 : i32
    %143 = tpu.assume_multiple %142, 8 : i32
    %144 = arith.index_cast %143 : i32 to index
    %c0_33 = arith.constant 0 : index
    %145 = vector.load %arg7[%144, %c0_33] : memref<64x128xf32, #tpu.memory_space<vmem>>, vector<8x128xf32>
    %146 = arith.truncf %141 : vector<8x32xf32> to vector<8x32xbf16>
    %cst_34 = arith.constant dense<0.000000e+00> : vector<8x128xf32>
    %147 = tpu.matmul %146, %19, %cst_34 {dimension_numbers = #tpu.dot_dimension_numbers<[1], [0], [0], [1], [0, 0, 1, 1], [], []>} : vector<8x32xbf16>, vector<32x128xbf16>, vector<8x128xf32> -> vector<8x128xf32>
    %148 = arith.addf %145, %147 : vector<8x128xf32>
    %149 = arith.mulf %148, %15 : vector<8x128xf32>
    %150 = math.tanh %149 : vector<8x128xf32>
    %151 = arith.mulf %150, %15 : vector<8x128xf32>
    %152 = arith.addf %151, %18 : vector<8x128xf32>
    %153 = vector.extract_strided_slice %152 {offsets = [0, 0], sizes = [8, 32], strides = [1, 1]} : vector<8x128xf32> to vector<8x32xf32>
    %154 = vector.extract_strided_slice %152 {offsets = [0, 32], sizes = [8, 32], strides = [1, 1]} : vector<8x128xf32> to vector<8x32xf32>
    %155 = vector.extract_strided_slice %152 {offsets = [0, 64], sizes = [8, 32], strides = [1, 1]} : vector<8x128xf32> to vector<8x32xf32>
    %156 = vector.extract_strided_slice %152 {offsets = [0, 96], sizes = [8, 32], strides = [1, 1]} : vector<8x128xf32> to vector<8x32xf32>
    %157 = arith.mulf %154, %139 : vector<8x32xf32>
    %158 = arith.mulf %153, %155 : vector<8x32xf32>
    %159 = arith.addf %157, %158 : vector<8x32xf32>
    %160 = math.tanh %159 : vector<8x32xf32>
    %161 = arith.mulf %156, %160 : vector<8x32xf32>
    %c7_i32 = arith.constant 7 : i32
    %c8_i32_35 = arith.constant 8 : i32
    %162 = arith.muli %c7_i32, %c8_i32_35 : i32
    %163 = tpu.assume_multiple %162, 8 : i32
    %164 = arith.index_cast %163 : i32 to index
    %c0_36 = arith.constant 0 : index
    %165 = vector.load %arg7[%164, %c0_36] : memref<64x128xf32, #tpu.memory_space<vmem>>, vector<8x128xf32>
    %166 = arith.truncf %161 : vector<8x32xf32> to vector<8x32xbf16>
    %cst_37 = arith.constant dense<0.000000e+00> : vector<8x128xf32>
    %167 = tpu.matmul %166, %19, %cst_37 {dimension_numbers = #tpu.dot_dimension_numbers<[1], [0], [0], [1], [0, 0, 1, 1], [], []>} : vector<8x32xbf16>, vector<32x128xbf16>, vector<8x128xf32> -> vector<8x128xf32>
    %168 = arith.addf %165, %167 : vector<8x128xf32>
    %169 = arith.mulf %168, %15 : vector<8x128xf32>
    %170 = math.tanh %169 : vector<8x128xf32>
    %171 = arith.mulf %170, %15 : vector<8x128xf32>
    %172 = arith.addf %171, %18 : vector<8x128xf32>
    %173 = vector.extract_strided_slice %172 {offsets = [0, 0], sizes = [8, 32], strides = [1, 1]} : vector<8x128xf32> to vector<8x32xf32>
    %174 = vector.extract_strided_slice %172 {offsets = [0, 32], sizes = [8, 32], strides = [1, 1]} : vector<8x128xf32> to vector<8x32xf32>
    %175 = vector.extract_strided_slice %172 {offsets = [0, 64], sizes = [8, 32], strides = [1, 1]} : vector<8x128xf32> to vector<8x32xf32>
    %176 = vector.extract_strided_slice %172 {offsets = [0, 96], sizes = [8, 32], strides = [1, 1]} : vector<8x128xf32> to vector<8x32xf32>
    %177 = arith.mulf %174, %159 : vector<8x32xf32>
    %178 = arith.mulf %173, %175 : vector<8x32xf32>
    %179 = arith.addf %177, %178 : vector<8x32xf32>
    %180 = math.tanh %179 : vector<8x32xf32>
    %181 = arith.mulf %176, %180 : vector<8x32xf32>
    %c8_i32_38 = arith.constant 8 : i32
    %c0_39 = arith.constant 0 : index
    %c0_40 = arith.constant 0 : index
    %182 = vector.load %arg4[%c0_39, %c0_40] : memref<1x32xf32, #tpu.memory_space<vmem>>, vector<1x32xf32>
    %183 = vector.broadcast %182 : vector<1x32xf32> to vector<8x32xf32>
    %184 = arith.mulf %181, %183 : vector<8x32xf32>
    %cst_41 = arith.constant dense<0.000000e+00> : vector<8xf32>
    %185 = vector.multi_reduction <add>, %184, %cst_41 [1] : vector<8x32xf32> to vector<8xf32>
    %186 = vector.shape_cast %185 : vector<8xf32> to vector<8x1xf32>
    %c0_42 = arith.constant 0 : index
    %187 = memref.load %arg5[%c0_42] : memref<1xf32, #tpu.memory_space<smem>>
    %188 = vector.broadcast %187 : f32 to vector<8x1xf32>
    %189 = arith.addf %186, %188 : vector<8x1xf32>
    %c0_43 = arith.constant 0 : index
    %c0_44 = arith.constant 0 : index
    %190 = vector.load %arg6[%c0_43, %c0_44] : memref<8x1xf32, #tpu.memory_space<vmem>>, vector<8x1xf32>
    tpu.vector_store %arg6[%c0_43, %c0_44], %189 {strides = array<i32>} : memref<8x1xf32, #tpu.memory_space<vmem>>, vector<8x1xf32>,
    return
  }
}

</mosaic_0001>

<llo_original>
// kernel: lstm_model_forward.1
$region0: #{lstm_model_forward.1}
  #allocation0 [shape = 'u32[]', space=smem, size = 0x4, offset = 0x4, fixed_abs, tag = 'smem constant byte address 0x4 - core index']
  #allocation1 [shape = 'u32[72,128]{1,0:T(1,128)}', space=vmem, size = 0x9000, scoped, tag = 'internal scratch']
  #allocation2 [shape = 'f32[64,128]{1,0:T(8,128)}', space=vmem, size = 0x8000, scoped, tag = 'scratch operand']
  #allocation3 [shape = 'f32[1]{0:T(128)S(6)}', space=smem, size = 0x200, scoped, tag = 'scoped memory for lstm_model_forward.1']
  %s0 = inlined_call_operand.vmem [shape: bf16[64,16], index: 0, kind: input, shape index: {}]
  %s1 = inlined_call_operand.vmem [shape: bf16[16,128], index: 1, kind: input, shape index: {}]
  %s2 = inlined_call_operand.vmem [shape: bf16[32,128], index: 2, kind: input, shape index: {}]
  %s3 = inlined_call_operand.vmem [shape: f32[1,128], index: 3, kind: input, shape index: {}]
  %s4 = inlined_call_operand.vmem [shape: f32[1,32], index: 4, kind: input, shape index: {}]
  %s5 = inlined_call_operand.<no memory space> [shape: f32[1], index: 5, kind: input, shape index: {}]
  %s6 = inlined_call_operand.vmem [shape: f32[8,1], index: 6, kind: output, shape index: {}]
  %s7 = sld [smem:[#allocation0]]
  $region34: #{lstm_model_forward.1} parent=0
    _
  %s9 = ssub.s32 1, %s7
  %s10 = scalar_select 0, %s9, %s7
  %11 = sst [smem:[#allocation3]] %s5
  // Predicated region
  $region2: #{lstm_model_forward.1} parent=0 // pred_check
    _
  $region3: #{lstm_model_forward.1} parent=0 // pred_check_branch
    %13 = sbr.rel (0) target = $region5
  $region4: #{lstm_model_forward.1} parent=0 // pred_region
    _
  $region5: #{lstm_model_forward.1} parent=0 // pred_fallthru
    _
  // Predicated region
  $region6: #{lstm_model_forward.1} parent=0 // pred_check
    _
  $region7: #{lstm_model_forward.1} parent=0 // pred_check_branch
    %15 = sbr.rel (0) target = $region9
  $region8: #{lstm_model_forward.1} parent=0 // pred_region
    _
  $region9: #{lstm_model_forward.1} parent=0 // pred_fallthru
    _
  // Predicated region
  $region10: #{lstm_model_forward.1} parent=0 // pred_check
    _
  $region11: #{lstm_model_forward.1} parent=0 // pred_check_branch
    %17 = sbr.rel (0) target = $region13
  $region12: #{lstm_model_forward.1} parent=0 // pred_region
    _
  $region13: #{lstm_model_forward.1} parent=0 // pred_fallthru
    _
  // Predicated region
  $region14: #{lstm_model_forward.1} parent=0 // pred_check
    _
  $region15: #{lstm_model_forward.1} parent=0 // pred_check_branch
    %19 = sbr.rel (0) target = $region17
  $region16: #{lstm_model_forward.1} parent=0 // pred_region
    _
  $region17: #{lstm_model_forward.1} parent=0 // pred_fallthru
    _
  // Predicated region
  $region18: #{lstm_model_forward.1} parent=0 // pred_check
    _
  $region19: #{lstm_model_forward.1} parent=0 // pred_check_branch
    %21 = sbr.rel (0) target = $region21
  $region20: #{lstm_model_forward.1} parent=0 // pred_region
    _
  $region21: #{lstm_model_forward.1} parent=0 // pred_fallthru
    _
  // Predicated region
  $region22: #{lstm_model_forward.1} parent=0 // pred_check
    _
  $region23: #{lstm_model_forward.1} parent=0 // pred_check_branch
    %23 = sbr.rel (0) target = $region25
  $region24: #{lstm_model_forward.1} parent=0 // pred_region
    _
  $region25: #{lstm_model_forward.1} parent=0 // pred_fallthru
    _
  %v25 = vld [vmem:[%s0] sm:$0xf]
  %v26 = vld [vmem:[%s0 + $0x4] sm:$0xf]
  %v27 = vld [vmem:[%s0 + $0x8] sm:$0xf]
  %v28 = vld [vmem:[%s0 + $0xc] sm:$0xf]
  %v29 = vld [vmem:[%s0 + $0x10] sm:$0xf]
  %v30 = vld [vmem:[%s0 + $0x14] sm:$0xf]
  %v31 = vld [vmem:[%s0 + $0x18] sm:$0xf]
  %v32 = vld [vmem:[%s0 + $0x1c] sm:$0xf]
  %v33 = vld [vmem:[%s1] sm:$0xf]
  %v34 = vld [vmem:[%s1 + $0x4] sm:$0xf]
  %v35 = vld [vmem:[%s3] sm:$0x1]
  %v37 = vperm.slane %v35, 0
  %v47 = vunpack.c.l.b16 %v25
  %v48 = vunpack.c.l.b16 %v26
  %v49 = vunpack.c.l.b16 %v27
  %v50 = vunpack.c.l.b16 %v28
  %v51 = vunpack.c.l.b16 %v29
  %v52 = vunpack.c.l.b16 %v30
  %v53 = vunpack.c.l.b16 %v31
  %v54 = vunpack.c.l.b16 %v32
  %v55 = vpack.c.b16 %v48, %v47
  %v56 = vpack.c.b16 %v50, %v49
  %v57 = vpack.c.b16 %v52, %v51
  %v58 = vpack.c.b16 %v54, %v53
  %v61 = vunpack.c.l.b16 %v33
  %v62 = vunpack.c.l.b16 %v34
  %v63 = vpack.c.b16 %v62, %v61
  %vm65 = vcmask 130048
  %v67 = vsel %vm65, %v55, 0
  %v70 = vsel %vm65, %v56, 0
  %v73 = vsel %vm65, %v57, 0
  %v76 = vsel %vm65, %v58, 0
  %78 = vmatpush.bf16.msra.mxu0 0
  %79 = vmatpush.bf16.msra.mxu0 0
  %80 = vmatpush.bf16.msra.mxu0 0
  %81 = vmatpush.bf16.msra.mxu0 0
  %82 = vmatpush.bf16.msra.mxu0 0
  %83 = vmatpush.bf16.msra.mxu0 0
  %84 = vmatpush.bf16.msra.mxu0 0
  %85 = vmatpush.bf16.msra.mxu0 %v63
  %86 = vmatmul.bf16.gmra.mxu0 %v67
  %v87 = vpop.f32.mrf.mxu0
  %v88 = vadd.f32 %v37, %v87
  %v89 = vpop.f32.mrf.mxu0
  %v90 = vadd.f32 %v37, %v89
  %91 = vmatmul.bf16.gmra.mxu0 %v70
  %v92 = vpop.f32.mrf.mxu0
  %v93 = vadd.f32 %v37, %v92
  %v94 = vpop.f32.mrf.mxu0
  %v95 = vadd.f32 %v37, %v94
  %96 = vmatmul.bf16.gmra.mxu0 %v73
  %v97 = vpop.f32.mrf.mxu0
  %v98 = vadd.f32 %v37, %v97
  %v99 = vpop.f32.mrf.mxu0
  %v100 = vadd.f32 %v37, %v99
  %101 = vmatmul.bf16.gmra.mxu0 %v76
  %v102 = vpop.f32.mrf.mxu0
  %v103 = vadd.f32 %v37, %v102
  %v104 = vpop.f32.mrf.mxu0
  %v105 = vadd.f32 %v37, %v104
  %106 = vdwg.mxu0
  %107 = vst [vmem:[#allocation2] sm:$0xff] %v88
  %108 = vst [vmem:[#allocation2 + $0x8] sm:$0xff] %v90
  %109 = vst [vmem:[#allocation2 + $0x10] sm:$0xff] %v93
  %110 = vst [vmem:[#allocation2 + $0x18] sm:$0xff] %v95
  %111 = vst [vmem:[#allocation2 + $0x20] sm:$0xff] %v98
  %112 = vst [vmem:[#allocation2 + $0x28] sm:$0xff] %v100
  %113 = vst [vmem:[#allocation2 + $0x30] sm:$0xff] %v103
  %114 = vst [vmem:[#allocation2 + $0x38] sm:$0xff] %v105
  %v115 = vlaneseq
  %v116 = vand.u32 %v115, 127
  %vm117 = vcmp.ge.s32.totalorder %v116, 64
  %vm118 = vcmp.lt.s32.totalorder %v116, 96
  %vm119 = vmand %vm117, %vm118
  %v120 = vsel %vm119, 1.0, 0.5
  %v121 = vsel %vm119, 0.0, 0.5
  %v122 = vld [vmem:[%s2] sm:$0xf]
  %v123 = vld [vmem:[%s2 + $0x4] sm:$0xf]
  %v124 = vld [vmem:[%s2 + $0x8] sm:$0xf]
  %v125 = vld [vmem:[%s2 + $0xc] sm:$0xf]
  %v126 = vld [vmem:[#allocation2] sm:$0xff]
  %v131 = vunpack.c.l.b16 %v122
  %v132 = vunpack.c.l.b16 %v123
  %v133 = vunpack.c.l.b16 %v124
  %v134 = vunpack.c.l.b16 %v125
  %v135 = vpack.c.b16 %v132, %v131
  %v136 = vpack.c.b16 %v134, %v133
  %vm139 = vcmask 261120
  %v141 = vsel %vm139, 0, 0
  %143 = vmatpush.bf16.msra.mxu0 0
  %144 = vmatpush.bf16.msra.mxu0 0
  %145 = vmatpush.bf16.msra.mxu0 0
  %146 = vmatpush.bf16.msra.mxu0 0
  %147 = vmatpush.bf16.msra.mxu0 0
  %148 = vmatpush.bf16.msra.mxu0 0
  %149 = vmatpush.bf16.msra.mxu0 %v136
  %150 = vmatpush.bf16.msra.mxu0 %v135
  %151 = vmatmul.bf16.gmra.mxu0 %v141
  %v152 = vpop.f32.mrf.mxu0
  %v153 = vadd.f32 0.0, %v152
  %v154 = vpop.f32.mrf.mxu0
  %155 = vdwg.mxu0
  %v156 = vadd.f32 %v126, %v153
  %v157 = vmul.f32 %v156, %v120
  %v158 = vtanh.pop %v157
  %v159 = vmul.f32 %v158, %v120
  %v160 = vadd.f32 %v159, %v121
  %v161 = vmul.f32 %v160, 0.0
  %163 = vrot.lane.b32.xlu0 %v160, 64
  %v164 = vpop.permute.xlu0 %163
  %v166 = vmul.f32 %v160, %v164
  %168 = vrot.lane.b32.xlu0 %v166, 32
  %v169 = vpop.permute.xlu0 %168
  %v171 = vadd.f32 %v161, %v169
  %v172 = vtanh.pop %v171
  %174 = vrot.lane.b32.xlu0 %v172, 64
  %v175 = vpop.permute.xlu0 %174
  %v177 = vmul.f32 %v160, %v175
  %s178 = scalar_lea.vmem [#allocation2], 8
  %v179 = vld [vmem:[%s178] sm:$0xff]
  %v180 = vpack.c.bf16 %v177, %v177
  %182 = vrot.lane.b32.xlu0 %v180, 32
  %v183 = vpop.permute.xlu0 %182
  %v185 = vsel %vm139, %v183, 0
  %187 = vmatpush.bf16.msra.mxu0 0
  %188 = vmatpush.bf16.msra.mxu0 0
  %189 = vmatpush.bf16.msra.mxu0 0
  %190 = vmatpush.bf16.msra.mxu0 0
  %191 = vmatpush.bf16.msra.mxu0 0
  %192 = vmatpush.bf16.msra.mxu0 0
  %193 = vmatpush.bf16.msra.mxu0 %v136
  %194 = vmatpush.bf16.msra.mxu0 %v135
  %195 = vmatmul.bf16.gmra.mxu0 %v185
  %v196 = vpop.f32.mrf.mxu0
  %v197 = vadd.f32 0.0, %v196
  %v198 = vpop.f32.mrf.mxu0
  %199 = vdwg.mxu0
  %v200 = vadd.f32 %v179, %v197
  %v201 = vmul.f32 %v200, %v120
  %v202 = vtanh.pop %v201
  %v203 = vmul.f32 %v202, %v120
  %v204 = vadd.f32 %v203, %v121
  %v205 = vmul.f32 %v204, %v171
  %207 = vrot.lane.b32.xlu0 %v204, 64
  %v208 = vpop.permute.xlu0 %207
  %v210 = vmul.f32 %v204, %v208
  %212 = vrot.lane.b32.xlu0 %v210, 32
  %v213 = vpop.permute.xlu0 %212
  %v215 = vadd.f32 %v205, %v213
  %v216 = vtanh.pop %v215
  %218 = vrot.lane.b32.xlu0 %v216, 64
  %v219 = vpop.permute.xlu0 %218
  %v221 = vmul.f32 %v204, %v219
  %s222 = scalar_lea.vmem [#allocation2], 16
  %v223 = vld [vmem:[%s222] sm:$0xff]
  %v224 = vpack.c.bf16 %v221, %v221
  %226 = vrot.lane.b32.xlu0 %v224, 32
  %v227 = vpop.permute.xlu0 %226
  %v229 = vsel %vm139, %v227, 0
  %231 = vmatpush.bf16.msra.mxu0 0
  %232 = vmatpush.bf16.msra.mxu0 0
  %233 = vmatpush.bf16.msra.mxu0 0
  %234 = vmatpush.bf16.msra.mxu0 0
  %235 = vmatpush.bf16.msra.mxu0 0
  %236 = vmatpush.bf16.msra.mxu0 0
  %237 = vmatpush.bf16.msra.mxu0 %v136
  %238 = vmatpush.bf16.msra.mxu0 %v135
  %239 = vmatmul.bf16.gmra.mxu0 %v229
  %v240 = vpop.f32.mrf.mxu0
  %v241 = vadd.f32 0.0, %v240
  %v242 = vpop.f32.mrf.mxu0
  %243 = vdwg.mxu0
  %v244 = vadd.f32 %v223, %v241
  %v245 = vmul.f32 %v244, %v120
  %v246 = vtanh.pop %v245
  %v247 = vmul.f32 %v246, %v120
  %v248 = vadd.f32 %v247, %v121
  %v249 = vmul.f32 %v248, %v215
  %251 = vrot.lane.b32.xlu0 %v248, 64
  %v252 = vpop.permute.xlu0 %251
  %v254 = vmul.f32 %v248, %v252
  %256 = vrot.lane.b32.xlu0 %v254, 32
  %v257 = vpop.permute.xlu0 %256
  %v259 = vadd.f32 %v249, %v257
  %v260 = vtanh.pop %v259
  %262 = vrot.lane.b32.xlu0 %v260, 64
  %v263 = vpop.permute.xlu0 %262
  %v265 = vmul.f32 %v248, %v263
  %s266 = scalar_lea.vmem [#allocation2], 24
  %v267 = vld [vmem:[%s266] sm:$0xff]
  %v268 = vpack.c.bf16 %v265, %v265
  %270 = vrot.lane.b32.xlu0 %v268, 32
  %v271 = vpop.permute.xlu0 %270
  %v273 = vsel %vm139, %v271, 0
  %275 = vmatpush.bf16.msra.mxu0 0
  %276 = vmatpush.bf16.msra.mxu0 0
  %277 = vmatpush.bf16.msra.mxu0 0
  %278 = vmatpush.bf16.msra.mxu0 0
  %279 = vmatpush.bf16.msra.mxu0 0
  %280 = vmatpush.bf16.msra.mxu0 0
  %281 = vmatpush.bf16.msra.mxu0 %v136
  %282 = vmatpush.bf16.msra.mxu0 %v135
  %283 = vmatmul.bf16.gmra.mxu0 %v273
  %v284 = vpop.f32.mrf.mxu0
  %v285 = vadd.f32 0.0, %v284
  %v286 = vpop.f32.mrf.mxu0
  %287 = vdwg.mxu0
  %v288 = vadd.f32 %v267, %v285
  %v289 = vmul.f32 %v288, %v120
  %v290 = vtanh.pop %v289
  %v291 = vmul.f32 %v290, %v120
  %v292 = vadd.f32 %v291, %v121
  %v293 = vmul.f32 %v292, %v259
  %295 = vrot.lane.b32.xlu0 %v292, 64
  %v296 = vpop.permute.xlu0 %295
  %v298 = vmul.f32 %v292, %v296
  %300 = vrot.lane.b32.xlu0 %v298, 32
  %v301 = vpop.permute.xlu0 %300
  %v303 = vadd.f32 %v293, %v301
  %v304 = vtanh.pop %v303
  %306 = vrot.lane.b32.xlu0 %v304, 64
  %v307 = vpop.permute.xlu0 %306
  %v309 = vmul.f32 %v292, %v307
  %s310 = scalar_lea.vmem [#allocation2], 32
  %v311 = vld [vmem:[%s310] sm:$0xff]
  %v312 = vpack.c.bf16 %v309, %v309
  %314 = vrot.lane.b32.xlu0 %v312, 32
  %v315 = vpop.permute.xlu0 %314
  %v317 = vsel %vm139, %v315, 0
  %319 = vmatpush.bf16.msra.mxu0 0
  %320 = vmatpush.bf16.msra.mxu0 0
  %321 = vmatpush.bf16.msra.mxu0 0
  %322 = vmatpush.bf16.msra.mxu0 0
  %323 = vmatpush.bf16.msra.mxu0 0
  %324 = vmatpush.bf16.msra.mxu0 0
  %325 = vmatpush.bf16.msra.mxu0 %v136
  %326 = vmatpush.bf16.msra.mxu0 %v135
  %327 = vmatmul.bf16.gmra.mxu0 %v317
  %v328 = vpop.f32.mrf.mxu0
  %v329 = vadd.f32 0.0, %v328
  %v330 = vpop.f32.mrf.mxu0
  %331 = vdwg.mxu0
  %v332 = vadd.f32 %v311, %v329
  %v333 = vmul.f32 %v332, %v120
  %v334 = vtanh.pop %v333
  %v335 = vmul.f32 %v334, %v120
  %v336 = vadd.f32 %v335, %v121
  %v337 = vmul.f32 %v336, %v303
  %339 = vrot.lane.b32.xlu0 %v336, 64
  %v340 = vpop.permute.xlu0 %339
  %v342 = vmul.f32 %v336, %v340
  %344 = vrot.lane.b32.xlu0 %v342, 32
  %v345 = vpop.permute.xlu0 %344
  %v347 = vadd.f32 %v337, %v345
  %v348 = vtanh.pop %v347
  %350 = vrot.lane.b32.xlu0 %v348, 64
  %v351 = vpop.permute.xlu0 %350
  %v353 = vmul.f32 %v336, %v351
  %s354 = scalar_lea.vmem [#allocation2], 40
  %v355 = vld [vmem:[%s354] sm:$0xff]
  %v356 = vpack.c.bf16 %v353, %v353
  %358 = vrot.lane.b32.xlu0 %v356, 32
  %v359 = vpop.permute.xlu0 %358
  %v361 = vsel %vm139, %v359, 0
  %363 = vmatpush.bf16.msra.mxu0 0
  %364 = vmatpush.bf16.msra.mxu0 0
  %365 = vmatpush.bf16.msra.mxu0 0
  %366 = vmatpush.bf16.msra.mxu0 0
  %367 = vmatpush.bf16.msra.mxu0 0
  %368 = vmatpush.bf16.msra.mxu0 0
  %369 = vmatpush.bf16.msra.mxu0 %v136
  %370 = vmatpush.bf16.msra.mxu0 %v135
  %371 = vmatmul.bf16.gmra.mxu0 %v361
  %v372 = vpop.f32.mrf.mxu0
  %v373 = vadd.f32 0.0, %v372
  %v374 = vpop.f32.mrf.mxu0
  %375 = vdwg.mxu0
  %v376 = vadd.f32 %v355, %v373
  %v377 = vmul.f32 %v376, %v120
  %v378 = vtanh.pop %v377
  %v379 = vmul.f32 %v378, %v120
  %v380 = vadd.f32 %v379, %v121
  %v381 = vmul.f32 %v380, %v347
  %383 = vrot.lane.b32.xlu0 %v380, 64
  %v384 = vpop.permute.xlu0 %383
  %v386 = vmul.f32 %v380, %v384
  %388 = vrot.lane.b32.xlu0 %v386, 32
  %v389 = vpop.permute.xlu0 %388
  %v391 = vadd.f32 %v381, %v389
  %v392 = vtanh.pop %v391
  %394 = vrot.lane.b32.xlu0 %v392, 64
  %v395 = vpop.permute.xlu0 %394
  %v397 = vmul.f32 %v380, %v395
  %s398 = scalar_lea.vmem [#allocation2], 48
  %v399 = vld [vmem:[%s398] sm:$0xff]
  %v400 = vpack.c.bf16 %v397, %v397
  %402 = vrot.lane.b32.xlu0 %v400, 32
  %v403 = vpop.permute.xlu0 %402
  %v405 = vsel %vm139, %v403, 0
  %407 = vmatpush.bf16.msra.mxu0 0
  %408 = vmatpush.bf16.msra.mxu0 0
  %409 = vmatpush.bf16.msra.mxu0 0
  %410 = vmatpush.bf16.msra.mxu0 0
  %411 = vmatpush.bf16.msra.mxu0 0
  %412 = vmatpush.bf16.msra.mxu0 0
  %413 = vmatpush.bf16.msra.mxu0 %v136
  %414 = vmatpush.bf16.msra.mxu0 %v135
  %415 = vmatmul.bf16.gmra.mxu0 %v405
  %v416 = vpop.f32.mrf.mxu0
  %v417 = vadd.f32 0.0, %v416
  %v418 = vpop.f32.mrf.mxu0
  %419 = vdwg.mxu0
  %v420 = vadd.f32 %v399, %v417
  %v421 = vmul.f32 %v420, %v120
  %v422 = vtanh.pop %v421
  %v423 = vmul.f32 %v422, %v120
  %v424 = vadd.f32 %v423, %v121
  %v425 = vmul.f32 %v424, %v391
  %427 = vrot.lane.b32.xlu0 %v424, 64
  %v428 = vpop.permute.xlu0 %427
  %v430 = vmul.f32 %v424, %v428
  %432 = vrot.lane.b32.xlu0 %v430, 32
  %v433 = vpop.permute.xlu0 %432
  %v435 = vadd.f32 %v425, %v433
  %v436 = vtanh.pop %v435
  %438 = vrot.lane.b32.xlu0 %v436, 64
  %v439 = vpop.permute.xlu0 %438
  %v441 = vmul.f32 %v424, %v439
  %s442 = scalar_lea.vmem [#allocation2], 56
  %v443 = vld [vmem:[%s442] sm:$0xff]
  %v444 = vpack.c.bf16 %v441, %v441
  %446 = vrot.lane.b32.xlu0 %v444, 32
  %v447 = vpop.permute.xlu0 %446
  %v449 = vsel %vm139, %v447, 0
  %451 = vmatpush.bf16.msra.mxu0 0
  %452 = vmatpush.bf16.msra.mxu0 0
  %453 = vmatpush.bf16.msra.mxu0 0
  %454 = vmatpush.bf16.msra.mxu0 0
  %455 = vmatpush.bf16.msra.mxu0 0
  %456 = vmatpush.bf16.msra.mxu0 0
  %457 = vmatpush.bf16.msra.mxu0 %v136
  %458 = vmatpush.bf16.msra.mxu0 %v135
  %459 = vmatmul.bf16.gmra.mxu0 %v449
  %v460 = vpop.f32.mrf.mxu0
  %v461 = vadd.f32 0.0, %v460
  %v462 = vpop.f32.mrf.mxu0
  %463 = vdwg.mxu0
  %v464 = vadd.f32 %v443, %v461
  %v465 = vmul.f32 %v464, %v120
  %v466 = vtanh.pop %v465
  %v467 = vmul.f32 %v466, %v120
  %v468 = vadd.f32 %v467, %v121
  %v469 = vmul.f32 %v468, %v435
  %471 = vrot.lane.b32.xlu0 %v468, 64
  %v472 = vpop.permute.xlu0 %471
  %v474 = vmul.f32 %v468, %v472
  %476 = vrot.lane.b32.xlu0 %v474, 32
  %v477 = vpop.permute.xlu0 %476
  %v479 = vadd.f32 %v469, %v477
  %v480 = vtanh.pop %v479
  %482 = vrot.lane.b32.xlu0 %v480, 64
  %v483 = vpop.permute.xlu0 %482
  %v485 = vmul.f32 %v468, %v483
  %v486 = vld [vmem:[%s4] sm:$0x1]
  %v488 = vperm.slane %v486, 0
  %489 = vrot.lane.b32.xlu0 %v488, 96
  %v490 = vpop.permute.xlu0 %489
  %v492 = vmul.f32 %v485, %v490
  %494 = vrot.lane.b32.xlu0 %v492, 32
  %v495 = vpop.permute.xlu0 %494
  %v497 = vsel %vm139, %v495, 0.0
  %498 = vadd.xlane.f32.xlu0 %v497
  %v499 = vpop.xlane.xlu0 %498
  %s500 = sld [smem:[#allocation3]]
  %v501 = vstv %s500
  %v502 = vadd.f32 %v499, %v501
  %vm503 = vcmask 7168
  %504 = vst.msk [vmem:[%s6] sm:$0xff] %vm503, %v502
  // Predicated region
  $region26: #{lstm_model_forward.1} parent=0 // pred_check
    _
  $region27: #{lstm_model_forward.1} parent=0 // pred_check_branch
    %506 = sbr.rel (0) target = $region29
  $region28: #{lstm_model_forward.1} parent=0 // pred_region
    _
  $region29: #{lstm_model_forward.1} parent=0 // pred_fallthru
    _
  // Predicated region
  $region30: #{lstm_model_forward.1} parent=0 // pred_check
    _
  $region31: #{lstm_model_forward.1} parent=0 // pred_check_branch
    %508 = sbr.rel (0) target = $region33
  $region32: #{lstm_model_forward.1} parent=0 // pred_region
    _
  $region33: #{lstm_model_forward.1} parent=0 // pred_fallthru
    _

</llo_original>
